<compile_context>
chip_gen: v6e
topology: v6e:2x2x1
jax: 0.10.0
libtpu: 0.0.40
codegen_flags: <defaults>
</compile_context>

<pallas_src>
import jax
import jax.numpy as jnp
from jax.experimental import pallas as pl
from jax.experimental.pallas import tpu as pltpu

EPS = 1e-5  # nn.LayerNorm default


def prenorm_kernel(x_ref, gamma_ref, beta_ref, w_ref, b_ref, o_ref):
    # x_ref: (TM, D) row tile; gamma/beta/b: (1, D); w: (D, D) bf16.
    x = x_ref[...].astype(jnp.float32)
    gamma = gamma_ref[...].astype(jnp.float32)
    beta = beta_ref[...].astype(jnp.float32)
    bias = b_ref[...].astype(jnp.float32)

    # --- LayerNorm over last axis (biased variance, like nn.LayerNorm) ---
    mean = jnp.mean(x, axis=-1, keepdims=True)
    xc = x - mean
    var = jnp.mean(xc * xc, axis=-1, keepdims=True)
    inv = jax.lax.rsqrt(var + EPS)
    normed = xc * inv * gamma + beta

    # --- fn: Linear(dim -> dim). bf16 operands, f32 accumulation (MXU). ---
    y = jnp.dot(
        normed.astype(jnp.bfloat16),
        w_ref[...],  # already bf16, no per-step cast
        preferred_element_type=jnp.float32,
    )
    y = y + bias

    o_ref[...] = y.astype(o_ref.dtype)


def prenorm_linear(x, gamma, beta, w, b, tm=256):
    """PreNorm(dim, fn=Linear(dim, dim)) forward.

    x: (batch, seq, dim) float32
    gamma, beta: (dim,)  -- LayerNorm affine params
    w: (dim, dim), b: (dim,) -- fn's Linear params (y = x @ w + b)
    tm: row-tile size (rounded/capped internally; multiple of 8).
    """
    batch, seq, dim = x.shape
    rows = batch * seq

    # Row tile: multiple of 8 sublanes, no bigger than (padded) rows.
    tm = int(tm)
    tm = max(8, (tm // 8) * 8)
    tm = min(tm, max(8, ((rows + 7) // 8) * 8))
    rows_p = pl.cdiv(rows, tm) * tm

    x2d = x.reshape(rows, dim)
    if rows_p != rows:
        # Padded rows are computed (harmlessly: var=0 -> rsqrt(eps)) and sliced off.
        x2d = jnp.pad(x2d, ((0, rows_p - rows), (0, 0)))

    gamma2d = gamma.reshape(1, dim)
    beta2d = beta.reshape(1, dim)
    b2d = b.reshape(1, dim)
    w_bf16 = w.astype(jnp.bfloat16)  # halves weight DMA; bf16 is MXU-native

    grid = (rows_p // tm,)

    # Rough VMEM budget: double-buffered x/out tiles + resident bf16 weight.
    vmem_bytes = (
        2 * 2 * tm * dim * 4          # x + out tiles, double-buffered, f32
        + dim * dim * 2               # bf16 weight, resident
        + 3 * dim * 4                 # gamma/beta/bias
        + 2 * tm * dim * 4            # f32 temporaries headroom
    )
    vmem_limit = min(100 * 1024 * 1024, max(32 * 1024 * 1024, 2 * vmem_bytes))

    cost = pl.CostEstimate(
        flops=2 * rows_p * dim * dim,
        transcendentals=rows_p,  # one rsqrt per row
        bytes_accessed=(
            rows_p * dim * 4      # x in
            + rows_p * dim * 4    # out
            + dim * dim * 2       # bf16 weight
            + 3 * dim * 4         # gamma/beta/bias
        ),
    )

    out2d = pl.pallas_call(
        prenorm_kernel,
        out_shape=jax.ShapeDtypeStruct((rows_p, dim), x.dtype),
        grid_spec=pltpu.PrefetchScalarGridSpec(
            num_scalar_prefetch=0,
            grid=grid,
            in_specs=[
                pl.BlockSpec((tm, dim), lambda i: (i, 0)),    # x row tile
                pl.BlockSpec((1, dim), lambda i: (0, 0)),     # gamma (resident)
                pl.BlockSpec((1, dim), lambda i: (0, 0)),     # beta  (resident)
                pl.BlockSpec((dim, dim), lambda i: (0, 0)),   # w     (resident)
                pl.BlockSpec((1, dim), lambda i: (0, 0)),     # bias  (resident)
            ],
            out_specs=pl.BlockSpec((tm, dim), lambda i: (i, 0)),
        ),
        compiler_params=pltpu.CompilerParams(
            dimension_semantics=("parallel",),   # rows independent -> 2-TC shard on v7x
            vmem_limit_bytes=vmem_limit,
        ),
        cost_estimate=cost,
    )(x2d, gamma2d, beta2d, w_bf16, b2d)

    if rows_p != rows:
        out2d = out2d[:rows]
    return out2d.reshape(batch, seq, dim)


def prenorm_ref(x, gamma, beta, w, b):
    """Pure-JAX f32 reference matching PyTorch PreNorm(LayerNorm(dim), Linear)."""
    mean = jnp.mean(x, axis=-1, keepdims=True)
    var = jnp.mean((x - mean) ** 2, axis=-1, keepdims=True)
    normed = (x - mean) / jnp.sqrt(var + EPS) * gamma + beta
    return normed @ w + b


if __name__ == "__main__":
    key = jax.random.PRNGKey(0)
    k_x, k_w = jax.random.split(key)

    # Lane-dense dim (multiple of 128) per perf review; rows tiled with tm=32
    # so the demo actually exercises the pipelined multi-step grid.
    batch, seq, dim = 2, 64, 128
    x = jax.random.normal(k_x, (batch, seq, dim), dtype=jnp.float32)

    # Deterministic parameter init (nn.LayerNorm default: gamma=1, beta=0).
    gamma = jnp.ones((dim,), dtype=jnp.float32)
    beta = jnp.zeros((dim,), dtype=jnp.float32)
    w = jax.random.normal(k_w, (dim, dim), dtype=jnp.float32) * (1.0 / dim**0.5)
    b = jnp.zeros((dim,), dtype=jnp.float32)

    out = prenorm_linear(x, gamma, beta, w, b, tm=32)
    jax.block_until_ready(out)

    ref = prenorm_ref(x, gamma, beta, w, b)
    assert out.shape == (batch, seq, dim)
    # bf16 MXU operands (f32 accumulate) -> ~1e-2-level deviation vs pure-f32 ref.
    assert jnp.allclose(out, ref, atol=3e-2, rtol=3e-2), float(
        jnp.max(jnp.abs(out - ref))
    )

    print("KERNEL_OK")
</pallas_src>

<mosaic_0001>
module attributes {stable_mosaic.version = 11 : i64} {
  func.func @prenorm_kernel(%arg0: i32, %arg1: memref<32x128xf32, #tpu.memory_space<vmem>>, %arg2: memref<1x128xf32, #tpu.memory_space<vmem>>, %arg3: memref<1x128xf32, #tpu.memory_space<vmem>>, %arg4: memref<128x128xbf16, #tpu.memory_space<vmem>>, %arg5: memref<1x128xf32, #tpu.memory_space<vmem>>, %arg6: memref<32x128xf32, #tpu.memory_space<vmem>>) attributes {dimension_semantics = [#tpu.dimension_semantics<parallel>], iteration_bounds = array<i64: 4>, scalar_prefetch = 0 : i64, scratch_operands = 0 : i64, tpu.core_type = #tpu.core_type<tc>, window_params = [{transform_indices = @transform_0, window_bounds = array<i64: 32, 128>}, {pipeline_mode = #tpu.pipeline_mode<synchronous>, transform_indices = @transform_1, window_bounds = array<i64: 1, 128>}, {pipeline_mode = #tpu.pipeline_mode<synchronous>, transform_indices = @transform_2, window_bounds = array<i64: 1, 128>}, {pipeline_mode = #tpu.pipeline_mode<synchronous>, transform_indices = @transform_3, window_bounds = array<i64: 128, 128>}, {pipeline_mode = #tpu.pipeline_mode<synchronous>, transform_indices = @transform_4, window_bounds = array<i64: 1, 128>}, {transform_indices = @transform_5, window_bounds = array<i64: 32, 128>}]} {
    %c0 = arith.constant 0 : index
    %c0_0 = arith.constant 0 : index
    %0 = vector.load %arg1[%c0, %c0_0] : memref<32x128xf32, #tpu.memory_space<vmem>>, vector<32x128xf32>
    %c0_1 = arith.constant 0 : index
    %c0_2 = arith.constant 0 : index
    %1 = vector.load %arg2[%c0_1, %c0_2] : memref<1x128xf32, #tpu.memory_space<vmem>>, vector<1x128xf32>
    %c0_3 = arith.constant 0 : index
    %c0_4 = arith.constant 0 : index
    %2 = vector.load %arg3[%c0_3, %c0_4] : memref<1x128xf32, #tpu.memory_space<vmem>>, vector<1x128xf32>
    %c0_5 = arith.constant 0 : index
    %c0_6 = arith.constant 0 : index
    %3 = vector.load %arg5[%c0_5, %c0_6] : memref<1x128xf32, #tpu.memory_space<vmem>>, vector<1x128xf32>
    %cst = arith.constant dense<0.000000e+00> : vector<32xf32>
    %4 = vector.multi_reduction <add>, %0, %cst [1] : vector<32x128xf32> to vector<32xf32>
    %5 = vector.shape_cast %4 : vector<32xf32> to vector<32x1xf32>
    %cst_7 = arith.constant 1.280000e+02 : f32
    %6 = vector.broadcast %cst_7 : f32 to vector<32x1xf32>
    %7 = arith.divf %5, %6 : vector<32x1xf32>
    %8 = vector.broadcast %7 : vector<32x1xf32> to vector<32x128xf32>
    %9 = arith.subf %0, %8 : vector<32x128xf32>
    %10 = arith.mulf %9, %9 : vector<32x128xf32>
    %cst_8 = arith.constant dense<0.000000e+00> : vector<32xf32>
    %11 = vector.multi_reduction <add>, %10, %cst_8 [1] : vector<32x128xf32> to vector<32xf32>
    %12 = vector.shape_cast %11 : vector<32xf32> to vector<32x1xf32>
    %cst_9 = arith.constant 1.280000e+02 : f32
    %13 = vector.broadcast %cst_9 : f32 to vector<32x1xf32>
    %14 = arith.divf %12, %13 : vector<32x1xf32>
    %cst_10 = arith.constant 9.99999974E-6 : f32
    %15 = vector.broadcast %cst_10 : f32 to vector<32x1xf32>
    %16 = arith.addf %14, %15 : vector<32x1xf32>
    %17 = math.rsqrt %16 : vector<32x1xf32>
    %18 = vector.broadcast %17 : vector<32x1xf32> to vector<32x128xf32>
    %19 = arith.mulf %9, %18 : vector<32x128xf32>
    %20 = vector.broadcast %1 : vector<1x128xf32> to vector<32x128xf32>
    %21 = arith.mulf %19, %20 : vector<32x128xf32>
    %22 = vector.broadcast %2 : vector<1x128xf32> to vector<32x128xf32>
    %23 = arith.addf %21, %22 : vector<32x128xf32>
    %24 = arith.truncf %23 : vector<32x128xf32> to vector<32x128xbf16>
    %c0_11 = arith.constant 0 : index
    %c0_12 = arith.constant 0 : index
    %25 = vector.load %arg4[%c0_11, %c0_12] : memref<128x128xbf16, #tpu.memory_space<vmem>>, vector<128x128xbf16>
    %cst_13 = arith.constant dense<0.000000e+00> : vector<32x128xf32>
    %26 = tpu.matmul %24, %25, %cst_13 {dimension_numbers = #tpu.dot_dimension_numbers<[1], [0], [0], [1], [0, 0, 1, 1], [], []>} : vector<32x128xbf16>, vector<128x128xbf16>, vector<32x128xf32> -> vector<32x128xf32>
    %27 = vector.broadcast %3 : vector<1x128xf32> to vector<32x128xf32>
    %28 = arith.addf %26, %27 : vector<32x128xf32>
    %c0_14 = arith.constant 0 : index
    %c0_15 = arith.constant 0 : index
    %29 = vector.load %arg6[%c0_14, %c0_15] : memref<32x128xf32, #tpu.memory_space<vmem>>, vector<32x128xf32>
    tpu.vector_store %arg6[%c0_14, %c0_15], %28 {strides = array<i32>} : memref<32x128xf32, #tpu.memory_space<vmem>>, vector<32x128xf32>,
    return
  }
  func.func @transform_0(%arg0: i32) -> (i32, i32) {
    %c0_i32 = arith.constant 0 : i32
    %c0_i32_0 = arith.constant 0 : i32
    return %arg0, %c0_i32 : i32, i32
  }
  func.func @transform_1(%arg0: i32) -> (i32, i32) {
    %c0_i32 = arith.constant 0 : i32
    %c0_i32_0 = arith.constant 0 : i32
    %c0_i32_1 = arith.constant 0 : i32
    return %c0_i32, %c0_i32_0 : i32, i32
  }
  func.func @transform_2(%arg0: i32) -> (i32, i32) {
    %c0_i32 = arith.constant 0 : i32
    %c0_i32_0 = arith.constant 0 : i32
    %c0_i32_1 = arith.constant 0 : i32
    return %c0_i32, %c0_i32_0 : i32, i32
  }
  func.func @transform_3(%arg0: i32) -> (i32, i32) {
    %c0_i32 = arith.constant 0 : i32
    %c0_i32_0 = arith.constant 0 : i32
    %c0_i32_1 = arith.constant 0 : i32
    return %c0_i32, %c0_i32_0 : i32, i32
  }
  func.func @transform_4(%arg0: i32) -> (i32, i32) {
    %c0_i32 = arith.constant 0 : i32
    %c0_i32_0 = arith.constant 0 : i32
    %c0_i32_1 = arith.constant 0 : i32
    return %c0_i32, %c0_i32_0 : i32, i32
  }
  func.func @transform_5(%arg0: i32) -> (i32, i32) {
    %c0_i32 = arith.constant 0 : i32
    %c0_i32_0 = arith.constant 0 : i32
    return %arg0, %c0_i32 : i32, i32
  }
}

</mosaic_0001>

<llo_original>
// kernel: tpu_custom_call.1
$region0: #{tpu_custom_call.1}
  #allocation0 [shape = 'u32[]', space=smem, size = 0x4, offset = 0x4, fixed_abs, tag = 'smem constant byte address 0x4 - core index']
  #allocation1 [shape = 'u32[144,128]{1,0:T(1,128)}', space=vmem, size = 0x12000, scoped, tag = 'internal scratch']
  %s0 = inlined_call_operand.hbm [shape: f32[128,128], index: 0, kind: input, shape index: {}]
  %s1 = inlined_call_operand.vmem [shape: f32[1,128], index: 1, kind: input, shape index: {}]
  %s2 = inlined_call_operand.vmem [shape: f32[1,128], index: 2, kind: input, shape index: {}]
  %s3 = inlined_call_operand.hbm [shape: bf16[128,128], index: 3, kind: input, shape index: {}]
  %s4 = inlined_call_operand.vmem [shape: f32[1,128], index: 4, kind: input, shape index: {}]
  %s5 = inlined_call_operand.hbm [shape: f32[128,128], index: 5, kind: output, shape index: {}]
  %s6 = sld [smem:[#allocation0]]
  $region61: #{tpu_custom_call.1} parent=0
    _
  %s8 = ssub.s32 1, %s6
  %s9 = scalar_select 0, %s8, %s6
  $region1: #{tpu_custom_call.1} parent=0
    #allocation2 [shape = 'u8[32768]{0}', space=vmem, size = 0x8000, scoped, tag = 'input window, operand 0']
    #allocation3 [shape = 's32[2]{0}', space=sflag, size = 0x8, scoped, tag = 'scoped memory for tpu_custom_call.1']
    #allocation4 [shape = 's32[2]{0}', space=sflag, size = 0x8, scoped, tag = 'scoped memory for tpu_custom_call.1']
    #allocation5 [shape = 'u8[32768]{0}', space=vmem, size = 0x8000, scoped, tag = 'input window, operand 3, single buffered']
    #allocation6 [shape = 's32[1]{0}', space=sflag, size = 0x4, scoped, tag = 'scoped memory for tpu_custom_call.1']
    #allocation7 [shape = 'u8[32768]{0}', space=vmem, size = 0x8000, scoped, tag = 'output window, operand 0']
    %10 = vsyncpa [#allocation3], 0
    %s11 = scalar_lea.sflag [#allocation3], 1
    %12 = vsyncpa %s11, 0
    %13 = vsyncpa [#allocation6], 0
    %14 = vsyncpa [#allocation4], 0
    %s15 = scalar_lea.sflag [#allocation4], 1
    %16 = vsyncpa %s15, 0
    loop: start=0, step=1, limit=6
    $region2: #{tpu_custom_call.1} parent=1 // loop_pre_header
      _
    $region3: #{tpu_custom_call.1} parent=1 // loop_header
      %s18 = sphi 0, %s22
      %p19 = scmp.ge.s32.totalorder %s18, 6
      %s28 = sphi 0, %s30
      %s31 = sphi 0, %s28
      %s32 = sphi 0, %s31
      %s48 = sphi 0, %s32
      %s52 = sphi 0, %s52
      %s54 = sphi 0, %s52
      %s55 = sphi 0, %s54
      %s69 = sphi 0, %s55
      %s73 = sphi 0, %s73
      %s75 = sphi 0, %s73
      %s76 = sphi 0, %s75
      %s90 = sphi 0, %s76
      %s94 = sphi 0, %s94
      %s96 = sphi 0, %s94
      %s97 = sphi 0, %s96
      %s111 = sphi 0, %s97
      %s115 = sphi 0, %s115
      %s117 = sphi 0, %s115
      %s118 = sphi 0, %s117
      %s132 = sphi 0, %s118
      %s138 = sphi 0, %s140
      %s141 = sphi 0, %s138
      %s142 = sphi 0, %s141
      %s158 = sphi 0, %s142
    $region4: #{tpu_custom_call.1} parent=1 // loop_header_branch
      %21 = sbr.rel (%p19) target = $region8
    $region5: #{tpu_custom_call.1} parent=1 // loop_body
      %s23 = ssub.s32 %s18, 1
      %s24 = ssub.s32 %s18, 2
      %s25 = sadd.s32 %s18, 1
      %s26 = ssub.s32 %s18, %s25
      %p27 = scmp.eq.s32.totalorder %s26, 0
      %s29 = sadd.s32 %s28, 1
      %s30 = scalar_select %p27, %s28, %s29
      %p33 = pneg %p27
      %p34 = scmp.eq.s32.totalorder %s18, 3
      %p35 = por %p33, %p34
      %p36 = scmp.ne.s32.totalorder %s28, %s31
      %p37 = scmp.eq.s32.totalorder %s18, 0
      %p38 = por %p36, %p37
      %p39 = scmp.ne.s32.totalorder %s28, %s31
      %p40 = scmp.eq.s32.totalorder %s23, 3
      %p41 = por %p39, %p40
      %p42 = scmp.ne.s32.totalorder %s31, %s32
      %p43 = scmp.eq.s32.totalorder %s23, 0
      %p44 = por %p42, %p43
      %p45 = scmp.ne.s32.totalorder %s31, %s32
      %p46 = scmp.eq.s32.totalorder %s24, 3
      %p47 = por %p45, %p46
      %p49 = scmp.ne.s32.totalorder %s32, %s48
      %p50 = scmp.eq.s32.totalorder %s24, 0
      %p51 = por %p49, %p50
      %s53 = sadd.s32 %s52, 1
      %p56 = scmp.eq.s32.totalorder %s18, 3
      %p57 = scmp.ne.s32.totalorder %s52, %s54
      %p58 = scmp.eq.s32.totalorder %s18, 0
      %p59 = por %p57, %p58
      %p60 = scmp.ne.s32.totalorder %s52, %s54
      %p61 = scmp.eq.s32.totalorder %s23, 3
      %p62 = por %p60, %p61
      %p63 = scmp.ne.s32.totalorder %s54, %s55
      %p64 = scmp.eq.s32.totalorder %s23, 0
      %p65 = por %p63, %p64
      %p66 = scmp.ne.s32.totalorder %s54, %s55
      %p67 = scmp.eq.s32.totalorder %s24, 3
      %p68 = por %p66, %p67
      %p70 = scmp.ne.s32.totalorder %s55, %s69
      %p71 = scmp.eq.s32.totalorder %s24, 0
      %p72 = por %p70, %p71
      %s74 = sadd.s32 %s73, 1
      %p77 = scmp.eq.s32.totalorder %s18, 3
      %p78 = scmp.ne.s32.totalorder %s73, %s75
      %p79 = scmp.eq.s32.totalorder %s18, 0
      %p80 = por %p78, %p79
      %p81 = scmp.ne.s32.totalorder %s73, %s75
      %p82 = scmp.eq.s32.totalorder %s23, 3
      %p83 = por %p81, %p82
      %p84 = scmp.ne.s32.totalorder %s75, %s76
      %p85 = scmp.eq.s32.totalorder %s23, 0
      %p86 = por %p84, %p85
      %p87 = scmp.ne.s32.totalorder %s75, %s76
      %p88 = scmp.eq.s32.totalorder %s24, 3
      %p89 = por %p87, %p88
      %p91 = scmp.ne.s32.totalorder %s76, %s90
      %p92 = scmp.eq.s32.totalorder %s24, 0
      %p93 = por %p91, %p92
      %s95 = sadd.s32 %s94, 1
      %p98 = scmp.eq.s32.totalorder %s18, 3
      %p99 = scmp.ne.s32.totalorder %s94, %s96
      %p100 = scmp.eq.s32.totalorder %s18, 0
      %p101 = por %p99, %p100
      %p102 = scmp.ne.s32.totalorder %s94, %s96
      %p103 = scmp.eq.s32.totalorder %s23, 3
      %p104 = por %p102, %p103
      %p105 = scmp.ne.s32.totalorder %s96, %s97
      %p106 = scmp.eq.s32.totalorder %s23, 0
      %p107 = por %p105, %p106
      %p108 = scmp.ne.s32.totalorder %s96, %s97
      %p109 = scmp.eq.s32.totalorder %s24, 3
      %p110 = por %p108, %p109
      %p112 = scmp.ne.s32.totalorder %s97, %s111
      %p113 = scmp.eq.s32.totalorder %s24, 0
      %p114 = por %p112, %p113
      %s116 = sadd.s32 %s115, 1
      %p119 = scmp.eq.s32.totalorder %s18, 3
      %p120 = scmp.ne.s32.totalorder %s115, %s117
      %p121 = scmp.eq.s32.totalorder %s18, 0
      %p122 = por %p120, %p121
      %p123 = scmp.ne.s32.totalorder %s115, %s117
      %p124 = scmp.eq.s32.totalorder %s23, 3
      %p125 = por %p123, %p124
      %p126 = scmp.ne.s32.totalorder %s117, %s118
      %p127 = scmp.eq.s32.totalorder %s23, 0
      %p128 = por %p126, %p127
      %p129 = scmp.ne.s32.totalorder %s117, %s118
      %p130 = scmp.eq.s32.totalorder %s24, 3
      %p131 = por %p129, %p130
      %p133 = scmp.ne.s32.totalorder %s118, %s132
      %p134 = scmp.eq.s32.totalorder %s24, 0
      %p135 = por %p133, %p134
      %s136 = ssub.s32 %s18, %s25
      %p137 = scmp.eq.s32.totalorder %s136, 0
      %s139 = sadd.s32 %s138, 1
      %s140 = scalar_select %p137, %s138, %s139
      %p143 = pneg %p137
      %p144 = scmp.eq.s32.totalorder %s18, 3
      %p145 = por %p143, %p144
      %p146 = scmp.ne.s32.totalorder %s138, %s141
      %p147 = scmp.eq.s32.totalorder %s18, 0
      %p148 = por %p146, %p147
      %p149 = scmp.ne.s32.totalorder %s138, %s141
      %p150 = scmp.eq.s32.totalorder %s23, 3
      %p151 = por %p149, %p150
      %p152 = scmp.ne.s32.totalorder %s141, %s142
      %p153 = scmp.eq.s32.totalorder %s23, 0
      %p154 = por %p152, %p153
      %p155 = scmp.ne.s32.totalorder %s141, %s142
      %p156 = scmp.eq.s32.totalorder %s24, 3
      %p157 = por %p155, %p156
      %p159 = scmp.ne.s32.totalorder %s142, %s158
      %p160 = scmp.eq.s32.totalorder %s24, 0
      %p161 = por %p159, %p160
      %p162 = scmp.le.s32.totalorder 1, %s18
      %p163 = scmp.lt.s32.totalorder %s18, 5
      %p164 = pnand %p162, %p163
      %p165 = pneg %p164
      // Predicated region
      $region9: #{tpu_custom_call.1} parent=5 // pred_check
        _
      $region10: #{tpu_custom_call.1} parent=5 // pred_check_branch
        %167 = sbr.rel (%p164) target = $region12
      $region11: #{tpu_custom_call.1} parent=5 // pred_region
        %s168 = ssub.s32 %s18, 1
        // Predicated region
        $region13: #{tpu_custom_call.1} parent=11 // pred_check
          %p169 = pneg %p65
        $region14: #{tpu_custom_call.1} parent=11 // pred_check_branch
          %171 = sbr.rel (%p169) target = $region16
        $region15: #{tpu_custom_call.1} parent=11 // pred_region
          _
        $region16: #{tpu_custom_call.1} parent=11 // pred_fallthru
          _
        // Predicated region
        $region17: #{tpu_custom_call.1} parent=11 // pred_check
          %p172 = pneg %p86
        $region18: #{tpu_custom_call.1} parent=11 // pred_check_branch
          %174 = sbr.rel (%p172) target = $region20
        $region19: #{tpu_custom_call.1} parent=11 // pred_region
          _
        $region20: #{tpu_custom_call.1} parent=11 // pred_fallthru
          _
        // Predicated region
        $region21: #{tpu_custom_call.1} parent=11 // pred_check
          %p175 = pneg %p107
        $region22: #{tpu_custom_call.1} parent=11 // pred_check_branch
          %177 = sbr.rel (%p175) target = $region24
        $region23: #{tpu_custom_call.1} parent=11 // pred_region
          %s179 = ssub.s32 1024, 1024
          %180 = vsyncadd [#allocation6], %s179
          %s181 = sshll.u32 [#allocation5], 4
          %s182 = int_to_ptr.vmem [resolvable:$true] %s181
          %187 = dma.hbm_to_vmem [thread:$0]  %s3, 1024, %s182, [#allocation6], 64, 64, 4
        $region24: #{tpu_custom_call.1} parent=11 // pred_fallthru
          _
        // Predicated region
        $region25: #{tpu_custom_call.1} parent=11 // pred_check
          %p188 = pneg %p128
        $region26: #{tpu_custom_call.1} parent=11 // pred_check_branch
          %190 = sbr.rel (%p188) target = $region28
        $region27: #{tpu_custom_call.1} parent=11 // pred_region
          _
        $region28: #{tpu_custom_call.1} parent=11 // pred_fallthru
          _
      $region12: #{tpu_custom_call.1} parent=5 // pred_fallthru
        _
      %p191 = scmp.lt.s32.totalorder %s18, 4
      // Predicated region
      $region29: #{tpu_custom_call.1} parent=5 // pred_check
        %p192 = pneg %p191
      $region30: #{tpu_custom_call.1} parent=5 // pred_check_branch
        %194 = sbr.rel (%p192) target = $region32
      $region31: #{tpu_custom_call.1} parent=5 // pred_region
        // Predicated region
        $region33: #{tpu_custom_call.1} parent=31 // pred_check
          %p195 = pneg %p38
        $region34: #{tpu_custom_call.1} parent=31 // pred_check_branch
          %197 = sbr.rel (%p195) target = $region36
        $region35: #{tpu_custom_call.1} parent=31 // pred_region
          %s198 = sand.u32 %s28, 1
          %s199 = scalar_lea.sflag [#allocation3], %s198
          %s200 = sand.u32 %s28, 1
          %s201 = smul.addr %s200, 32
          %s202 = scalar_lea.vmem [#allocation2], %s201
          %s203 = smul.u32 4, %s18
          %s205 = ssub.s32 512, 512
          %206 = vsyncadd %s199, %s205
          %s207 = smul.addr %s203, 128
          %s208 = scalar_lea.hbm %s0, %s207
          %s209 = sshll.u32 %s202, 4
          %s210 = int_to_ptr.vmem [resolvable:$true] %s209
          %215 = dma.hbm_to_vmem [thread:$0]  %s208, 512, %s210, %s199, 128, 128, 8
        $region36: #{tpu_custom_call.1} parent=31 // pred_fallthru
          _
      $region32: #{tpu_custom_call.1} parent=5 // pred_fallthru
        _
      %p216 = scmp.le.s32.totalorder 1, %s18
      %p217 = scmp.lt.s32.totalorder %s18, 5
      %p218 = pnand %p216, %p217
      %p219 = pneg %p218
      // Predicated region
      $region37: #{tpu_custom_call.1} parent=5 // pred_check
        _
      $region38: #{tpu_custom_call.1} parent=5 // pred_check_branch
        %221 = sbr.rel (%p218) target = $region40
      $region39: #{tpu_custom_call.1} parent=5 // pred_region
        %s222 = ssub.s32 %s18, 1
        %s223 = sand.u32 %s31, 1
        %s224 = scalar_lea.sflag [#allocation3], %s223
        %s225 = sand.u32 %s31, 1
        %s226 = smul.addr %s225, 32
        %s227 = scalar_lea.vmem [#allocation2], %s226
        // Predicated region
        $region41: #{tpu_custom_call.1} parent=39 // pred_check
          %p228 = pneg %p44
        $region42: #{tpu_custom_call.1} parent=39 // pred_check_branch
          %230 = sbr.rel (%p228) target = $region44
        $region43: #{tpu_custom_call.1} parent=39 // pred_region
          %231 = dma.done %s224, 512
        $region44: #{tpu_custom_call.1} parent=39 // pred_fallthru
          _
        // Predicated region
        $region45: #{tpu_custom_call.1} parent=39 // pred_check
          %p232 = pneg %p107
        $region46: #{tpu_custom_call.1} parent=39 // pred_check_branch
          %234 = sbr.rel (%p232) target = $region48
        $region47: #{tpu_custom_call.1} parent=39 // pred_region
          %235 = dma.done [#allocation6], 1024
        $region48: #{tpu_custom_call.1} parent=39 // pred_fallthru
          _
        %s236 = sand.u32 %s31, 1
        %s237 = scalar_lea.sflag [#allocation3], %s236
        %s238 = sand.u32 %s31, 1
        %s239 = smul.addr %s238, 32
        %s240 = scalar_lea.vmem [#allocation2], %s239
        %p241 = pneg %p44
        %p242 = pneg %p41
        %p243 = pneg %p65
        %p244 = pneg %p62
        %p245 = pneg %p86
        %p246 = pneg %p83
        %p247 = pneg %p107
        %p248 = pneg %p104
        %p249 = pneg %p128
        %p250 = pneg %p125
        %p251 = pneg %p154
        %p252 = pneg %p151
        %s253 = sand.u32 %s141, 1
        %s254 = scalar_lea.sflag [#allocation4], %s253
        %s255 = sand.u32 %s141, 1
        %s256 = smul.addr %s255, 32
        %s257 = scalar_lea.vmem [#allocation7], %s256
        %s258 = smul.u32 4, %s23
        %s259 = smul.u32 4, %s23
        %v261 = vld [vmem:[%s227] sm:$0xff]
        %v262 = vld [vmem:[%s227 + $0x8] sm:$0xff]
        %v263 = vld [vmem:[%s227 + $0x10] sm:$0xff]
        %v264 = vld [vmem:[%s227 + $0x18] sm:$0xff]
        %v265 = vld [vmem:[%s1] sm:$0x1]
        %v266 = vld [vmem:[%s2] sm:$0x1]
        %v267 = vld [vmem:[%s4] sm:$0x1]
        %268 = vadd.xlane.f32.xlu0 %v261
        %v269 = vpop.xlane.xlu0 %268
        %270 = vadd.xlane.f32.xlu0 %v262
        %v271 = vpop.xlane.xlu0 %270
        %272 = vadd.xlane.f32.xlu0 %v263
        %v273 = vpop.xlane.xlu0 %272
        %274 = vadd.xlane.f32.xlu0 %v264
        %v275 = vpop.xlane.xlu0 %274
        %v276 = vrcp.pop 128.0
        %v277 = vmul.f32 %v269, %v276
        %v278 = vmul.f32 %v271, %v276
        %v279 = vmul.f32 %v273, %v276
        %v280 = vmul.f32 %v275, %v276
        %v281 = vsub.f32 %v261, %v277
        %v282 = vsub.f32 %v262, %v278
        %v283 = vsub.f32 %v263, %v279
        %v284 = vsub.f32 %v264, %v280
        %v285 = vmul.f32 %v281, %v281
        %v286 = vmul.f32 %v282, %v282
        %v287 = vmul.f32 %v283, %v283
        %v288 = vmul.f32 %v284, %v284
        %289 = vadd.xlane.f32.xlu0 %v285
        %v290 = vpop.xlane.xlu0 %289
        %291 = vadd.xlane.f32.xlu0 %v286
        %v292 = vpop.xlane.xlu0 %291
        %293 = vadd.xlane.f32.xlu0 %v287
        %v294 = vpop.xlane.xlu0 %293
        %295 = vadd.xlane.f32.xlu0 %v288
        %v296 = vpop.xlane.xlu0 %295
        %v297 = vmul.f32 %v290, %v276
        %v298 = vmul.f32 %v292, %v276
        %v299 = vmul.f32 %v294, %v276
        %v300 = vmul.f32 %v296, %v276
        %v301 = vadd.f32 %v297, 1e-05
        %v302 = vadd.f32 %v298, 1e-05
        %v303 = vadd.f32 %v299, 1e-05
        %v304 = vadd.f32 %v300, 1e-05
        %v305 = vrsqrt.pop %v301
        %v306 = vrsqrt.pop %v302
        %v307 = vrsqrt.pop %v303
        %v308 = vrsqrt.pop %v304
        %v309 = vmul.f32 %v281, %v305
        %v310 = vmul.f32 %v282, %v306
        %v311 = vmul.f32 %v283, %v307
        %v312 = vmul.f32 %v284, %v308
        %v314 = vlaneseq
        %v315 = vshrl.u32 %v314, 7
        %v316 = vsub.s32 0, %v315
        %v317 = vrot.slane %v265, %v316
        %v319 = vmul.f32 %v309, %v317
        %v320 = vmul.f32 %v310, %v317
        %v321 = vmul.f32 %v311, %v317
        %v322 = vmul.f32 %v312, %v317
        %v324 = vlaneseq
        %v325 = vshrl.u32 %v324, 7
        %v326 = vsub.s32 0, %v325
        %v327 = vrot.slane %v266, %v326
        %v329 = vadd.f32 %v319, %v327
        %v330 = vadd.f32 %v320, %v327
        %v331 = vadd.f32 %v321, %v327
        %v332 = vadd.f32 %v322, %v327
        %v333 = vpack.c.bf16 %v330, %v329
        %v334 = vpack.c.bf16 %v332, %v331
        %v335 = vld [vmem:[#allocation5] sm:$0xf]
        %v336 = vld [vmem:[#allocation5 + $0x4] sm:$0xf]
        %v337 = vld [vmem:[#allocation5 + $0x8] sm:$0xf]
        %v338 = vld [vmem:[#allocation5 + $0xc] sm:$0xf]
        %v339 = vld [vmem:[#allocation5 + $0x10] sm:$0xf]
        %v340 = vld [vmem:[#allocation5 + $0x14] sm:$0xf]
        %v341 = vld [vmem:[#allocation5 + $0x18] sm:$0xf]
        %v342 = vld [vmem:[#allocation5 + $0x1c] sm:$0xf]
        %v343 = vld [vmem:[#allocation5 + $0x20] sm:$0xf]
        %v344 = vld [vmem:[#allocation5 + $0x24] sm:$0xf]
        %v345 = vld [vmem:[#allocation5 + $0x28] sm:$0xf]
        %v346 = vld [vmem:[#allocation5 + $0x2c] sm:$0xf]
        %v347 = vld [vmem:[#allocation5 + $0x30] sm:$0xf]
        %v348 = vld [vmem:[#allocation5 + $0x34] sm:$0xf]
        %v349 = vld [vmem:[#allocation5 + $0x38] sm:$0xf]
        %v350 = vld [vmem:[#allocation5 + $0x3c] sm:$0xf]
        %v352 = vlaneseq
        %v353 = vshrl.u32 %v352, 7
        %v354 = vsub.s32 0, %v353
        %v355 = vrot.slane %v267, %v354
        %v373 = vunpack.c.l.b16 %v335
        %v374 = vunpack.c.l.b16 %v336
        %v375 = vunpack.c.l.b16 %v337
        %v376 = vunpack.c.l.b16 %v338
        %v377 = vunpack.c.l.b16 %v339
        %v378 = vunpack.c.l.b16 %v340
        %v379 = vunpack.c.l.b16 %v341
        %v380 = vunpack.c.l.b16 %v342
        %v381 = vunpack.c.l.b16 %v343
        %v382 = vunpack.c.l.b16 %v344
        %v383 = vunpack.c.l.b16 %v345
        %v384 = vunpack.c.l.b16 %v346
        %v385 = vunpack.c.l.b16 %v347
        %v386 = vunpack.c.l.b16 %v348
        %v387 = vunpack.c.l.b16 %v349
        %v388 = vunpack.c.l.b16 %v350
        %v389 = vpack.c.b16 %v374, %v373
        %v390 = vpack.c.b16 %v376, %v375
        %v391 = vpack.c.b16 %v378, %v377
        %v392 = vpack.c.b16 %v380, %v379
        %v393 = vpack.c.b16 %v382, %v381
        %v394 = vpack.c.b16 %v384, %v383
        %v395 = vpack.c.b16 %v386, %v385
        %v396 = vpack.c.b16 %v388, %v387
        %405 = vmatprep.subr.bf16.mxu0 0
        %406 = vmatpush1.bf16.msra.mxu0 %v396
        %407 = vmatprep.subr.bf16.mxu0 0
        %408 = vmatpush1.bf16.msra.mxu0 %v395
        %409 = vmatprep.subr.bf16.mxu0 0
        %410 = vmatpush1.bf16.msra.mxu0 %v394
        %411 = vmatprep.subr.bf16.mxu0 0
        %412 = vmatpush1.bf16.msra.mxu0 %v393
        %413 = vmatprep.subr.bf16.mxu0 0
        %414 = vmatpush1.bf16.msra.mxu0 %v392
        %415 = vmatprep.subr.bf16.mxu0 0
        %416 = vmatpush1.bf16.msra.mxu0 %v391
        %417 = vmatprep.subr.bf16.mxu0 0
        %418 = vmatpush1.bf16.msra.mxu0 %v390
        %419 = vmatprep.subr.bf16.mxu0 0
        %420 = vmatpush1.bf16.msra.mxu0 %v389
        %421 = vmatprep.subr.bf16.mxu0 0
        %422 = vmatpush2.bf16.msra.mxu0 0
        %423 = vmatprep.subr.bf16.mxu0 0
        %424 = vmatpush2.bf16.msra.mxu0 0
        %425 = vmatprep.subr.bf16.mxu0 0
        %426 = vmatpush2.bf16.msra.mxu0 0
        %427 = vmatprep.subr.bf16.mxu0 0
        %428 = vmatpush2.bf16.msra.mxu0 0
        %429 = vmatprep.subr.bf16.mxu0 0
        %430 = vmatpush2.bf16.msra.mxu0 0
        %431 = vmatprep.subr.bf16.mxu0 0
        %432 = vmatpush2.bf16.msra.mxu0 0
        %433 = vmatprep.subr.bf16.mxu0 0
        %434 = vmatpush2.bf16.msra.mxu0 0
        %435 = vmatprep.subr.bf16.mxu0 0
        %436 = vmatpush2.bf16.msra.mxu0 0
        %437 = vmatprep.mubr.bf16.mxu0 0
        %438 = vmatmul.mubr.bf16.gmra.mxu0 %v333
        %v439 = vpop.f32.mrf.mxu0
        %v440 = vadd.f32 %v355, %v439
        %v441 = vpop.f32.mrf.mxu0
        %v442 = vpop.f32.mrf.mxu0
        %v443 = vadd.f32 %v355, %v442
        %v444 = vpop.f32.mrf.mxu0
        %445 = vmatprep.mubr.bf16.mxu0 0
        %446 = vmatmul.mubr.bf16.gmra.mxu0 %v334
        %v447 = vpop.f32.mrf.mxu0
        %v448 = vadd.f32 %v355, %v447
        %v449 = vpop.f32.mrf.mxu0
        %v450 = vpop.f32.mrf.mxu0
        %v451 = vadd.f32 %v355, %v450
        %v452 = vpop.f32.mrf.mxu0
        %453 = vdwg.mxu0
        %454 = vst [vmem:[%s257] sm:$0xff] %v440
        %455 = vst [vmem:[%s257 + $0x8] sm:$0xff] %v443
        %456 = vst [vmem:[%s257 + $0x10] sm:$0xff] %v448
        %457 = vst [vmem:[%s257 + $0x18] sm:$0xff] %v451
        %s458 = sand.u32 %s141, 1
        %s459 = scalar_lea.sflag [#allocation4], %s458
        %s460 = sand.u32 %s141, 1
        %s461 = smul.addr %s460, 32
        %s462 = scalar_lea.vmem [#allocation7], %s461
        // Predicated region
        $region49: #{tpu_custom_call.1} parent=39 // pred_check
          %p463 = pneg %p151
        $region50: #{tpu_custom_call.1} parent=39 // pred_check_branch
          %465 = sbr.rel (%p463) target = $region52
        $region51: #{tpu_custom_call.1} parent=39 // pred_region
          %s466 = smul.u32 4, %s23
          %s468 = ssub.s32 512, 512
          %469 = vsyncadd %s459, %s468
          %s470 = smul.addr %s466, 128
          %s471 = scalar_lea.hbm %s5, %s470
          %s472 = sshll.u32 %s462, 4
          %s473 = int_to_ptr.vmem [resolvable:$true] %s472
          %478 = dma.vmem_to_hbm [thread:$0]  %s473, 512, %s471, %s459, 128, 128, 8
        $region52: #{tpu_custom_call.1} parent=39 // pred_fallthru
          _
      $region40: #{tpu_custom_call.1} parent=5 // pred_fallthru
        _
      %p479 = scmp.le.s32.totalorder 2, %s18
      // Predicated region
      $region53: #{tpu_custom_call.1} parent=5 // pred_check
        %p480 = pneg %p479
      $region54: #{tpu_custom_call.1} parent=5 // pred_check_branch
        %482 = sbr.rel (%p480) target = $region56
      $region55: #{tpu_custom_call.1} parent=5 // pred_region
        %s483 = ssub.s32 %s18, 2
        // Predicated region
        $region57: #{tpu_custom_call.1} parent=55 // pred_check
          %p484 = pneg %p157
        $region58: #{tpu_custom_call.1} parent=55 // pred_check_branch
          %486 = sbr.rel (%p484) target = $region60
        $region59: #{tpu_custom_call.1} parent=55 // pred_region
          %s487 = sand.u32 %s142, 1
          %s488 = scalar_lea.sflag [#allocation4], %s487
          %s489 = sand.u32 %s142, 1
          %s490 = smul.addr %s489, 32
          %s491 = scalar_lea.vmem [#allocation7], %s490
          %492 = dma.done %s488, 512
        $region60: #{tpu_custom_call.1} parent=55 // pred_fallthru
          _
      $region56: #{tpu_custom_call.1} parent=5 // pred_fallthru
        _
    $region6: #{tpu_custom_call.1} parent=1 // loop_footer
      %s22 = sadd.s32 1, %s18
    $region7: #{tpu_custom_call.1} parent=1 // loop_footer_branch
      %17 = sbr.rel target = $region3
    $region8: #{tpu_custom_call.1} parent=1 // loop_exit
      _
    %493 = vsyncpa [#allocation3], 1
    %s494 = scalar_lea.sflag [#allocation3], 1
    %495 = vsyncpa %s494, 1
    %496 = vsyncpa [#allocation6], 1
    %497 = vsyncpa [#allocation4], 1
    %s498 = scalar_lea.sflag [#allocation4], 1
    %499 = vsyncpa %s498, 1

</llo_original>
